<compile_context>
chip_gen: v5e
topology: v5e:2x2
jax: 0.10.0
libtpu: 0.0.40
codegen_flags: <defaults>
</compile_context>

<pallas_src>
import jax
import jax.numpy as jnp
from jax import lax
from jax.experimental import pallas as pl
from jax.experimental.pallas import tpu as pltpu


def _round_up(x, m):
    return ((x + m - 1) // m) * m


# --------------------------------------------------------------------------
# Pallas kernel: grouped implicit-GEMM conv body.
# grid = (G, M_tiles, N_tiles, K_tiles)  -- reduction (K) axis last.
#   x_ref  : (TM, TK)  im2col activation tile (group dim squeezed)
#   w_ref  : (TK, TN)  prepacked weight tile
#   b_ref  : (1,  TN)  bias tile (f32)
#   o_ref  : (TM, TN)  output tile (TN multiple of 128 -> unmasked stores)
#   acc_ref: (TM, TN)  f32 VMEM scratch accumulator
# --------------------------------------------------------------------------
def _gemm_bias_kernel(x_ref, w_ref, b_ref, o_ref, acc_ref):
    k = pl.program_id(3)

    @pl.when(k == 0)
    def _():
        # Bias folded into the accumulator init (saves the epilogue VPU add).
        acc_ref[...] = jnp.broadcast_to(b_ref[...], acc_ref.shape)

    acc_ref[...] += jnp.dot(x_ref[...], w_ref[...],
                            preferred_element_type=jnp.float32)

    @pl.when(k == pl.num_programs(3) - 1)
    def _():
        o_ref[...] = acc_ref[...].astype(o_ref.dtype)


def _grouped_conv_gemm(x_col, w_col, b_col, out_dtype, tm, tn, tk):
    """x_col: (G, M_pad, K_pad); w_col: (G, K_pad, N_pad); b_col: (G,1,N_pad).

    All padded dims are exact multiples of the tile sizes (tm, tn, tk).
    """
    G, M_pad, K_pad = x_col.shape
    _, _, N_pad = w_col.shape
    grid = (G, M_pad // tm, N_pad // tn, K_pad // tk)

    return pl.pallas_call(
        _gemm_bias_kernel,
        out_shape=jax.ShapeDtypeStruct((G, M_pad, N_pad), out_dtype),
        grid_spec=pltpu.PrefetchScalarGridSpec(
            num_scalar_prefetch=0,
            grid=grid,
            in_specs=[
                pl.BlockSpec((None, tm, tk), lambda g, i, j, k: (g, i, k)),
                # When K_pad == tk and N_pad == tn the block index below is
                # constant across (i, j, k), so the per-group weight stays
                # VMEM-resident across all M tiles (no re-DMA).
                pl.BlockSpec((None, tk, tn), lambda g, i, j, k: (g, k, j)),
                pl.BlockSpec((None, 1, tn), lambda g, i, j, k: (g, 0, j)),
            ],
            out_specs=pl.BlockSpec((None, tm, tn),
                                   lambda g, i, j, k: (g, i, j)),
            scratch_shapes=[pltpu.VMEM((tm, tn), jnp.float32)],
        ),
        compiler_params=pltpu.CompilerParams(
            dimension_semantics=("parallel", "parallel", "parallel",
                                 "arbitrary"),
            vmem_limit_bytes=32 * 1024 * 1024,
            # Let XLA fuse the im2col / pad / cast producer into the
            # activation operand instead of materializing x_col in HBM.
            allow_input_fusion=[True, False, False],
        ),
    )(x_col, w_col, b_col)


def _im2col_nhwc(x_pad, KH, KW, H_out, W_out, stride, dilation):
    """(N, H_pad, W_pad, C) -> (N, H_out, W_out, KH*KW, C)  [wrapper-side]."""
    N, _, _, C = x_pad.shape
    sh, sw = stride
    dh, dw = dilation
    patches = []
    for kh in range(KH):
        for kw in range(KW):
            h0, w0 = kh * dh, kw * dw
            patches.append(lax.slice(
                x_pad,
                (0, h0, w0, 0),
                (N, h0 + (H_out - 1) * sh + 1,
                 w0 + (W_out - 1) * sw + 1, C),
                (1, sh, sw, 1)))
    return jnp.stack(patches, axis=3)


class IPEXConv2dPallas:
    """JAX/Pallas analogue of _IPEXConvNd (2-D case) forward."""

    _PAD_MODE_MAP = {"reflect": "reflect", "replicate": "edge",
                     "circular": "wrap"}

    def __init__(self, weight_oihw, bias, stride, padding, dilation, groups,
                 padding_mode="zeros", compute_dtype=jnp.bfloat16):
        self.stride = tuple(stride)
        self.padding = tuple(padding)
        self.dilation = tuple(dilation)
        self.groups = int(groups)
        self.padding_mode = padding_mode
        # mirrors _IPEXConvNd: real conv padding is 0 when F.pad handles it
        self._real_padding = (self.padding if padding_mode == "zeros"
                              else (0, 0))

        C_out, cin_g, KH, KW = weight_oihw.shape
        G = self.groups
        cout_g = C_out // G
        C_in = G * cin_g
        K_g = KH * KW * cin_g
        self.out_channels = C_out
        self.kernel_size = (KH, KW)
        self._cin_g, self._cout_g = cin_g, cout_g

        self._compute_dtype = (compute_dtype if compute_dtype is not None
                               else weight_oihw.dtype)
        if self._compute_dtype == jnp.float32:
            self._tm_cap, self._tn_cap, self._tk_cap = 512, 512, 512
        else:  # bf16 (default): larger K tiles, half the DMA bytes
            self._tm_cap, self._tn_cap, self._tk_cap = 512, 512, 1024

        # Grouped convs with small per-group extents (ResNeXt / depthwise):
        # fold all groups into one dense GEMM with a block-diagonal weight
        # instead of padding each group's K/N to 128 lanes.
        self._fold_groups = (G == 1) or (cout_g < 128) or (K_g < 128)

        # --- weight "prepacking" (analogue of ipex_prepack ctx.pack) -----
        # Contraction ordered (kh, kw, cin) to match the im2col patch
        # ordering; K/N padded to the chosen tile so MXU operands are
        # 128-lane dense.  Zero padding is numerically inert and padded
        # output lanes are sliced off in __call__.
        if self._fold_groups:
            K_tot, N_tot = KH * KW * C_in, C_out
            wg = weight_oihw.reshape(G, cout_g, cin_g, KH, KW)
            wg = jnp.transpose(wg, (3, 4, 0, 2, 1))  # (KH,KW,G,cin_g,cout_g)
            if G > 1:
                eye = jnp.eye(G, dtype=wg.dtype)
                wg = wg[:, :, :, :, None, :] * eye[None, None, :, None, :, None]
                w2d = wg.reshape(K_tot, N_tot)       # block-diagonal
            else:
                w2d = wg.reshape(K_tot, N_tot)
            TK = min(self._tk_cap, _round_up(K_tot, 128))
            TN = min(self._tn_cap, _round_up(N_tot, 128))
            K_pad, N_pad = _round_up(K_tot, TK), _round_up(N_tot, TN)
            w2d = jnp.pad(w2d, ((0, K_pad - K_tot), (0, N_pad - N_tot)))
            self._w_col = w2d[None].astype(self._compute_dtype)
            b = bias if bias is not None else jnp.zeros((C_out,), jnp.float32)
            b = jnp.pad(b.astype(jnp.float32), (0, N_pad - N_tot))
            self._b_col = b.reshape(1, 1, N_pad)
            self._G_eff, self._K = 1, K_tot
        else:
            TK = min(self._tk_cap, _round_up(K_g, 128))
            TN = min(self._tn_cap, _round_up(cout_g, 128))
            K_pad, N_pad = _round_up(K_g, TK), _round_up(cout_g, TN)
            w = weight_oihw.reshape(G, cout_g, cin_g, KH, KW)
            w = jnp.transpose(w, (0, 3, 4, 2, 1)).reshape(G, K_g, cout_g)
            w = jnp.pad(w, ((0, 0), (0, K_pad - K_g), (0, N_pad - cout_g)))
            self._w_col = w.astype(self._compute_dtype)
            b = bias if bias is not None else jnp.zeros((C_out,), jnp.float32)
            b = b.astype(jnp.float32).reshape(G, cout_g)
            b = jnp.pad(b, ((0, 0), (0, N_pad - cout_g)))
            self._b_col = b.reshape(G, 1, N_pad)
            self._G_eff, self._K = G, K_g

        self._K_pad, self._N_pad = K_pad, N_pad
        self._TK, self._TN = TK, TN

    def __call__(self, x_nchw):
        out_dtype = x_nchw.dtype
        KH, KW = self.kernel_size
        sh, sw = self.stride
        dh, dw = self.dilation
        cdt = self._compute_dtype

        # ---- padding (F.pad analogue for non-'zeros' modes) -------------
        # NOTE: non-'zeros' modes support symmetric (ph, pw) padding only,
        # consistent with the 2-D _IPEXConvNd case.
        if self.padding_mode != "zeros":
            ph, pw = self.padding
            x_nchw = jnp.pad(
                x_nchw, ((0, 0), (0, 0), (ph, ph), (pw, pw)),
                mode=self._PAD_MODE_MAP[self.padding_mode])
            ph = pw = 0
        else:
            ph, pw = self._real_padding

        # Cast early: halves im2col / DMA bytes on the bf16 path.
        x_nhwc = jnp.transpose(x_nchw, (0, 2, 3, 1)).astype(cdt)  # -> NHWC
        x_pad = jnp.pad(x_nhwc, ((0, 0), (ph, ph), (pw, pw), (0, 0)))
        N, H_pad, W_pad, C = x_pad.shape
        H_out = (H_pad - (dh * (KH - 1) + 1)) // sh + 1
        W_out = (W_pad - (dw * (KW - 1) + 1)) // sw + 1
        M = N * H_out * W_out

        # ---- M tile: pad up to the tile; keep >=2 parallel blocks --------
        m128 = _round_up(M, 128)
        TM = min(self._tm_cap, m128)
        n_par_other = self._G_eff * (self._N_pad // self._TN)
        if n_par_other <= 1 and m128 > 128 and m128 <= TM:
            # v7x megacore: don't let the only parallel axis collapse to 1.
            TM = _round_up((m128 + 1) // 2, 128)
        M_pad = _round_up(M, TM)

        # ---- im2col + packing (layout plumbing; fused into the kernel's
        #      activation operand via allow_input_fusion when XLA accepts) --
        patches = _im2col_nhwc(x_pad, KH, KW, H_out, W_out,
                               self.stride, self.dilation)
        if self._fold_groups:
            x_col = patches.reshape(M, KH * KW * C)
            x_col = jnp.pad(x_col, ((0, M_pad - M),
                                    (0, self._K_pad - self._K)))[None]
        else:
            G, cin_g = self.groups, self._cin_g
            patches = patches.reshape(N, H_out, W_out, KH * KW, G, cin_g)
            x_col = jnp.transpose(patches, (4, 0, 1, 2, 3, 5)).reshape(
                G, M, KH * KW * cin_g)
            x_col = jnp.pad(x_col, ((0, 0), (0, M_pad - M),
                                    (0, self._K_pad - self._K)))

        # ---- grouped implicit-GEMM Pallas kernel --------------------------
        y_col = _grouped_conv_gemm(x_col, self._w_col, self._b_col, out_dtype,
                                   TM, self._TN, self._TK)

        # ---- unpack: drop padded rows/lanes, back to NCHW -----------------
        if self._fold_groups:
            y = y_col[0, :M, :self.out_channels].reshape(
                N, H_out, W_out, self.out_channels)
            y = jnp.transpose(y, (0, 3, 1, 2))
        else:
            cout_g = self._cout_g
            y = y_col[:, :M, :cout_g].reshape(
                self.groups, N, H_out, W_out, cout_g)
            y = jnp.transpose(y, (1, 0, 4, 2, 3)).reshape(
                N, self.out_channels, H_out, W_out)
        return y


if __name__ == "__main__":
    # Small, deterministic Conv2d config consistent with _IPEXConvNd wrapping
    # an nn.Conv2d(in=4, out=8, kernel=3, stride=1, padding=1, bias=True).
    N, C_in, H, W = 2, 4, 16, 16
    C_out, KH, KW = 8, 3, 3
    stride, padding, dilation, groups = (1, 1), (1, 1), (1, 1), 1

    key = jax.random.PRNGKey(0)
    kx, kw_, kb = jax.random.split(key, 3)
    x = jax.random.normal(kx, (N, C_in, H, W), dtype=jnp.float32)
    weight = (jax.random.normal(kw_, (C_out, C_in // groups, KH, KW),
                                dtype=jnp.float32) * 0.1)
    bias = jax.random.normal(kb, (C_out,), dtype=jnp.float32) * 0.1

    # Reference: XLA convolution with identical semantics (== F.conv2d).
    y_ref = lax.conv_general_dilated(
        x, weight, window_strides=stride, padding=[(1, 1), (1, 1)],
        rhs_dilation=dilation, feature_group_count=groups,
        dimension_numbers=("NCHW", "OIHW", "NCHW")) + bias[None, :, None, None]

    # ---- strict f32 compute path --------------------------------------------
    conv_f32 = IPEXConv2dPallas(weight, bias, stride, padding, dilation,
                                groups, compute_dtype=jnp.float32)
    y = jax.block_until_ready(conv_f32(x))
    assert y.shape == (N, C_out, H, W)
    assert jnp.allclose(y, y_ref, atol=1e-4, rtol=1e-4), float(
        jnp.max(jnp.abs(y - y_ref)))

    # ---- default bf16 MXU path (f32 accumulation) ---------------------------
    conv_bf16 = IPEXConv2dPallas(weight, bias, stride, padding, dilation,
                                 groups)
    y_bf16 = jax.block_until_ready(conv_bf16(x))
    assert jnp.allclose(y_bf16, y_ref, atol=5e-2, rtol=5e-2), float(
        jnp.max(jnp.abs(y_bf16 - y_ref)))

    # ---- grouped / strided / dilated / no-bias path (block-diag fold) ------
    groups2, stride2, padding2, dilation2 = 2, (2, 2), (2, 2), (2, 2)
    w2 = (jax.random.normal(kw_, (C_out, C_in // groups2, KH, KW),
                            dtype=jnp.float32) * 0.1)
    conv_g = IPEXConv2dPallas(w2, None, stride2, padding2, dilation2, groups2,
                              compute_dtype=jnp.float32)
    y_g = jax.block_until_ready(conv_g(x))
    y_g_ref = lax.conv_general_dilated(
        x, w2, window_strides=stride2, padding=[padding2, padding2],
        rhs_dilation=dilation2, feature_group_count=groups2,
        dimension_numbers=("NCHW", "OIHW", "NCHW"))
    assert y_g.shape == y_g_ref.shape
    assert jnp.allclose(y_g, y_g_ref, atol=1e-4, rtol=1e-4), float(
        jnp.max(jnp.abs(y_g - y_g_ref)))

    print("KERNEL_OK")
</pallas_src>

<mosaic_0001>
module attributes {stable_mosaic.version = 11 : i64} {
  func.func @_gemm_bias_kernel(%arg0: i32, %arg1: i32, %arg2: i32, %arg3: i32, %arg4: memref<1x256x128xf32, #tpu.memory_space<vmem>>, %arg5: memref<1x128x128xf32, #tpu.memory_space<vmem>>, %arg6: memref<1x1x128xf32, #tpu.memory_space<vmem>>, %arg7: memref<1x256x128xf32, #tpu.memory_space<vmem>>, %arg8: memref<256x128xf32, #tpu.memory_space<vmem>>) attributes {dimension_semantics = [#tpu.dimension_semantics<parallel>, #tpu.dimension_semantics<parallel>, #tpu.dimension_semantics<parallel>, #tpu.dimension_semantics<arbitrary>], iteration_bounds = array<i64: 1, 2, 1, 1>, scalar_prefetch = 0 : i64, scratch_operands = 1 : i64, tpu.core_type = #tpu.core_type<tc>, window_params = [{transform_indices = @transform_0, window_bounds = array<i64: 1, 256, 128>}, {transform_indices = @transform_1, window_bounds = array<i64: 1, 128, 128>}, {transform_indices = @transform_2, window_bounds = array<i64: 1, 1, 128>}, {transform_indices = @transform_3, window_bounds = array<i64: 1, 256, 128>}]} {
    %c0_i32 = arith.constant 0 : i32
    %0 = arith.cmpi eq, %arg3, %c0_i32 : i32
    %1 = arith.extui %0 : i1 to i32
    %c0_i32_0 = arith.constant 0 : i32
    %2 = arith.cmpi ne, %1, %c0_i32_0 : i32
    scf.if %2 {
      %c0_12 = arith.constant 0 : index
      %c0_13 = arith.constant 0 : index
      %c0_14 = arith.constant 0 : index
      %14 = vector.load %arg6[%c0_12, %c0_13, %c0_14] : memref<1x1x128xf32, #tpu.memory_space<vmem>>, vector<1x1x128xf32>
      %15 = vector.shape_cast %14 : vector<1x1x128xf32> to vector<1x128xf32>
      %16 = vector.shape_cast %15 : vector<1x128xf32> to vector<1x128xf32>
      %17 = vector.broadcast %16 : vector<1x128xf32> to vector<256x128xf32>
      %c0_15 = arith.constant 0 : index
      %c0_16 = arith.constant 0 : index
      %18 = vector.load %arg8[%c0_15, %c0_16] : memref<256x128xf32, #tpu.memory_space<vmem>>, vector<256x128xf32>
      tpu.vector_store %arg8[%c0_15, %c0_16], %17 {strides = array<i32>} : memref<256x128xf32, #tpu.memory_space<vmem>>, vector<256x128xf32>,
    } else {
    }
    %c0 = arith.constant 0 : index
    %c0_1 = arith.constant 0 : index
    %3 = vector.load %arg8[%c0, %c0_1] : memref<256x128xf32, #tpu.memory_space<vmem>>, vector<256x128xf32>
    %c0_2 = arith.constant 0 : index
    %c0_3 = arith.constant 0 : index
    %c0_4 = arith.constant 0 : index
    %4 = vector.load %arg4[%c0_2, %c0_3, %c0_4] : memref<1x256x128xf32, #tpu.memory_space<vmem>>, vector<1x256x128xf32>
    %5 = vector.shape_cast %4 : vector<1x256x128xf32> to vector<256x128xf32>
    %c0_5 = arith.constant 0 : index
    %c0_6 = arith.constant 0 : index
    %c0_7 = arith.constant 0 : index
    %6 = vector.load %arg5[%c0_5, %c0_6, %c0_7] : memref<1x128x128xf32, #tpu.memory_space<vmem>>, vector<1x128x128xf32>
    %7 = vector.shape_cast %6 : vector<1x128x128xf32> to vector<128x128xf32>
    %cst = arith.constant dense<0.000000e+00> : vector<256x128xf32>
    %8 = tpu.matmul %5, %7, %cst {dimension_numbers = #tpu.dot_dimension_numbers<[1], [0], [0], [1], [0, 0, 1, 1], [], []>} : vector<256x128xf32>, vector<128x128xf32>, vector<256x128xf32> -> vector<256x128xf32>
    %9 = arith.addf %3, %8 : vector<256x128xf32>
    %c0_8 = arith.constant 0 : index
    %c0_9 = arith.constant 0 : index
    %10 = vector.load %arg8[%c0_8, %c0_9] : memref<256x128xf32, #tpu.memory_space<vmem>>, vector<256x128xf32>
    tpu.vector_store %arg8[%c0_8, %c0_9], %9 {strides = array<i32>} : memref<256x128xf32, #tpu.memory_space<vmem>>, vector<256x128xf32>,
    %c0_i32_10 = arith.constant 0 : i32
    %11 = arith.cmpi eq, %arg3, %c0_i32_10 : i32
    %12 = arith.extui %11 : i1 to i32
    %c0_i32_11 = arith.constant 0 : i32
    %13 = arith.cmpi ne, %12, %c0_i32_11 : i32
    scf.if %13 {
      %c0_12 = arith.constant 0 : index
      %c0_13 = arith.constant 0 : index
      %14 = vector.load %arg8[%c0_12, %c0_13] : memref<256x128xf32, #tpu.memory_space<vmem>>, vector<256x128xf32>
      %c0_14 = arith.constant 0 : index
      %c0_15 = arith.constant 0 : index
      %c0_16 = arith.constant 0 : index
      %15 = vector.load %arg7[%c0_14, %c0_15, %c0_16] : memref<1x256x128xf32, #tpu.memory_space<vmem>>, vector<1x256x128xf32>
      %16 = vector.shape_cast %15 : vector<1x256x128xf32> to vector<256x128xf32>
      %17 = vector.shape_cast %14 : vector<256x128xf32> to vector<1x256x128xf32>
      tpu.vector_store %arg7[%c0_14, %c0_15, %c0_16], %17 {strides = array<i32>} : memref<1x256x128xf32, #tpu.memory_space<vmem>>, vector<1x256x128xf32>,
    } else {
    }
    return
  }
  func.func @transform_0(%arg0: i32, %arg1: i32, %arg2: i32, %arg3: i32) -> (i32, i32, i32) {
    %c0_i32 = arith.constant 0 : i32
    return %arg0, %arg1, %arg3 : i32, i32, i32
  }
  func.func @transform_1(%arg0: i32, %arg1: i32, %arg2: i32, %arg3: i32) -> (i32, i32, i32) {
    %c0_i32 = arith.constant 0 : i32
    return %arg0, %arg3, %arg2 : i32, i32, i32
  }
  func.func @transform_2(%arg0: i32, %arg1: i32, %arg2: i32, %arg3: i32) -> (i32, i32, i32) {
    %c0_i32 = arith.constant 0 : i32
    %c0_i32_0 = arith.constant 0 : i32
    return %arg0, %c0_i32, %arg2 : i32, i32, i32
  }
  func.func @transform_3(%arg0: i32, %arg1: i32, %arg2: i32, %arg3: i32) -> (i32, i32, i32) {
    %c0_i32 = arith.constant 0 : i32
    return %arg0, %arg1, %arg2 : i32, i32, i32
  }
}

</mosaic_0001>

<llo_original>
// kernel: tpu_custom_call.1
$region0: #{tpu_custom_call.1}
  #allocation0 [shape = 'u32[]', space=smem, size = 0x4, offset = 0x4, fixed_abs, tag = 'smem constant byte address 0x4 - core index']
  #allocation1 [shape = 'u32[72,128]{1,0:T(1,128)}', space=vmem, size = 0x9000, scoped, tag = 'internal scratch']
  #allocation2 [shape = 'f32[256,128]{1,0:T(8,128)}', space=vmem, size = 0x20000, scoped, tag = 'scratch operand']
  %s0 = inlined_call_operand.hbm [shape: f32[1,512,128], index: 0, kind: input, shape index: {}]
  %s1 = inlined_call_operand.hbm [shape: f32[1,128,128], index: 1, kind: input, shape index: {}]
  %s2 = inlined_call_operand.vmem [shape: f32[1,1,128], index: 2, kind: input, shape index: {}]
  %s3 = inlined_call_operand.hbm [shape: f32[1,512,128], index: 3, kind: output, shape index: {}]
  %s4 = sld [smem:[#allocation0]]
  $region61: #{tpu_custom_call.1} parent=0
    _
  %s6 = ssub.s32 1, %s4
  %s7 = scalar_select 0, %s6, %s4
  $region1: #{tpu_custom_call.1} parent=0
    #allocation3 [shape = 'u8[262144]{0}', space=vmem, size = 0x40000, scoped, tag = 'input window, operand 0']
    #allocation4 [shape = 's32[2]{0}', space=sflag, size = 0x8, scoped, tag = 'scoped memory for tpu_custom_call.1']
    #allocation5 [shape = 's32[2]{0}', space=sflag, size = 0x8, scoped, tag = 'scoped memory for tpu_custom_call.1']
    #allocation6 [shape = 'u8[65536]{0}', space=vmem, size = 0x10000, scoped, tag = 'input window, operand 1, single buffered']
    #allocation7 [shape = 's32[1]{0}', space=sflag, size = 0x4, scoped, tag = 'scoped memory for tpu_custom_call.1']
    #allocation8 [shape = 'u8[262144]{0}', space=vmem, size = 0x40000, scoped, tag = 'output window, operand 0']
    %8 = vsyncpa [#allocation4], 0
    %s9 = scalar_lea.sflag [#allocation4], 1
    %10 = vsyncpa %s9, 0
    %11 = vsyncpa [#allocation7], 0
    %12 = vsyncpa [#allocation5], 0
    %s13 = scalar_lea.sflag [#allocation5], 1
    %14 = vsyncpa %s13, 0
    loop: start=0, step=1, limit=4
    $region2: #{tpu_custom_call.1} parent=1 // loop_pre_header
      _
    $region3: #{tpu_custom_call.1} parent=1 // loop_header
      %s16 = sphi 0, %s20
      %p17 = scmp.ge.s32.totalorder %s16, 4
      %s23 = sphi 0, %s49
      %s24 = sphi 0, %s45
      %s25 = sphi 0, %s41
      %s26 = sphi 0, %s37
      %s27 = sphi 0, %s23
      %s28 = sphi 0, %s24
      %s29 = sphi 0, %s25
      %s30 = sphi 0, %s26
      %s31 = sphi 0, %s27
      %s32 = sphi 0, %s28
      %s33 = sphi 0, %s29
      %s34 = sphi 0, %s30
      %s56 = sphi 0, %s58
      %s59 = sphi 0, %s56
      %s60 = sphi 0, %s59
      %s76 = sphi 0, %s60
      %s86 = sphi 0, %s88
      %s89 = sphi 0, %s86
      %s90 = sphi 0, %s89
      %s106 = sphi 0, %s90
      %s114 = sphi 0, %s116
      %s117 = sphi 0, %s114
      %s118 = sphi 0, %s117
      %s134 = sphi 0, %s118
      %s144 = sphi 0, %s146
      %s147 = sphi 0, %s144
      %s148 = sphi 0, %s147
      %s164 = sphi 0, %s148
    $region4: #{tpu_custom_call.1} parent=1 // loop_header_branch
      %19 = sbr.rel (%p17) target = $region8
    $region5: #{tpu_custom_call.1} parent=1 // loop_body
      %s21 = ssub.s32 %s16, 1
      %s22 = ssub.s32 %s16, 2
      %s35 = sadd.s32 1, %s26
      %p36 = scmp.ge.s32.totalorder %s35, 1
      %s37 = scalar_select %p36, 0, %s35
      %s38 = sadd.s32 1, %s25
      %s39 = scalar_select %p36, %s38, %s25
      %p40 = scmp.ge.s32.totalorder %s39, 1
      %s41 = scalar_select %p40, 0, %s39
      %s42 = sadd.s32 1, %s24
      %s43 = scalar_select %p40, %s42, %s24
      %p44 = scmp.ge.s32.totalorder %s43, 2
      %s45 = scalar_select %p44, 0, %s43
      %s46 = sadd.s32 1, %s23
      %s47 = scalar_select %p44, %s46, %s23
      %p48 = scmp.ge.s32.totalorder %s47, 1
      %s49 = scalar_select %p48, 0, %s47
      %s50 = ssub.s32 %s23, %s49
      %s51 = ssub.s32 %s24, %s45
      %s52 = sor.u32 %s50, %s51
      %s53 = ssub.s32 %s26, %s37
      %s54 = sor.u32 %s52, %s53
      %p55 = scmp.eq.s32.totalorder %s54, 0
      %s57 = sadd.s32 %s56, 1
      %s58 = scalar_select %p55, %s56, %s57
      %p61 = pneg %p55
      %p62 = scmp.eq.s32.totalorder %s16, 1
      %p63 = por %p61, %p62
      %p64 = scmp.ne.s32.totalorder %s56, %s59
      %p65 = scmp.eq.s32.totalorder %s16, 0
      %p66 = por %p64, %p65
      %p67 = scmp.ne.s32.totalorder %s56, %s59
      %p68 = scmp.eq.s32.totalorder %s21, 1
      %p69 = por %p67, %p68
      %p70 = scmp.ne.s32.totalorder %s59, %s60
      %p71 = scmp.eq.s32.totalorder %s21, 0
      %p72 = por %p70, %p71
      %p73 = scmp.ne.s32.totalorder %s59, %s60
      %p74 = scmp.eq.s32.totalorder %s22, 1
      %p75 = por %p73, %p74
      %p77 = scmp.ne.s32.totalorder %s60, %s76
      %p78 = scmp.eq.s32.totalorder %s22, 0
      %p79 = por %p77, %p78
      %s80 = ssub.s32 %s23, %s49
      %s81 = ssub.s32 %s26, %s37
      %s82 = sor.u32 %s80, %s81
      %s83 = ssub.s32 %s25, %s41
      %s84 = sor.u32 %s82, %s83
      %p85 = scmp.eq.s32.totalorder %s84, 0
      %s87 = sadd.s32 %s86, 1
      %s88 = scalar_select %p85, %s86, %s87
      %p91 = pneg %p85
      %p92 = scmp.eq.s32.totalorder %s16, 1
      %p93 = por %p91, %p92
      %p94 = scmp.ne.s32.totalorder %s86, %s89
      %p95 = scmp.eq.s32.totalorder %s16, 0
      %p96 = por %p94, %p95
      %p97 = scmp.ne.s32.totalorder %s86, %s89
      %p98 = scmp.eq.s32.totalorder %s21, 1
      %p99 = por %p97, %p98
      %p100 = scmp.ne.s32.totalorder %s89, %s90
      %p101 = scmp.eq.s32.totalorder %s21, 0
      %p102 = por %p100, %p101
      %p103 = scmp.ne.s32.totalorder %s89, %s90
      %p104 = scmp.eq.s32.totalorder %s22, 1
      %p105 = por %p103, %p104
      %p107 = scmp.ne.s32.totalorder %s90, %s106
      %p108 = scmp.eq.s32.totalorder %s22, 0
      %p109 = por %p107, %p108
      %s110 = ssub.s32 %s23, %s49
      %s111 = ssub.s32 %s25, %s41
      %s112 = sor.u32 %s110, %s111
      %p113 = scmp.eq.s32.totalorder %s112, 0
      %s115 = sadd.s32 %s114, 1
      %s116 = scalar_select %p113, %s114, %s115
      %p119 = pneg %p113
      %p120 = scmp.eq.s32.totalorder %s16, 1
      %p121 = por %p119, %p120
      %p122 = scmp.ne.s32.totalorder %s114, %s117
      %p123 = scmp.eq.s32.totalorder %s16, 0
      %p124 = por %p122, %p123
      %p125 = scmp.ne.s32.totalorder %s114, %s117
      %p126 = scmp.eq.s32.totalorder %s21, 1
      %p127 = por %p125, %p126
      %p128 = scmp.ne.s32.totalorder %s117, %s118
      %p129 = scmp.eq.s32.totalorder %s21, 0
      %p130 = por %p128, %p129
      %p131 = scmp.ne.s32.totalorder %s117, %s118
      %p132 = scmp.eq.s32.totalorder %s22, 1
      %p133 = por %p131, %p132
      %p135 = scmp.ne.s32.totalorder %s118, %s134
      %p136 = scmp.eq.s32.totalorder %s22, 0
      %p137 = por %p135, %p136
      %s138 = ssub.s32 %s23, %s49
      %s139 = ssub.s32 %s24, %s45
      %s140 = sor.u32 %s138, %s139
      %s141 = ssub.s32 %s25, %s41
      %s142 = sor.u32 %s140, %s141
      %p143 = scmp.eq.s32.totalorder %s142, 0
      %s145 = sadd.s32 %s144, 1
      %s146 = scalar_select %p143, %s144, %s145
      %p149 = pneg %p143
      %p150 = scmp.eq.s32.totalorder %s16, 1
      %p151 = por %p149, %p150
      %p152 = scmp.ne.s32.totalorder %s144, %s147
      %p153 = scmp.eq.s32.totalorder %s16, 0
      %p154 = por %p152, %p153
      %p155 = scmp.ne.s32.totalorder %s144, %s147
      %p156 = scmp.eq.s32.totalorder %s21, 1
      %p157 = por %p155, %p156
      %p158 = scmp.ne.s32.totalorder %s147, %s148
      %p159 = scmp.eq.s32.totalorder %s21, 0
      %p160 = por %p158, %p159
      %p161 = scmp.ne.s32.totalorder %s147, %s148
      %p162 = scmp.eq.s32.totalorder %s22, 1
      %p163 = por %p161, %p162
      %p165 = scmp.ne.s32.totalorder %s148, %s164
      %p166 = scmp.eq.s32.totalorder %s22, 0
      %p167 = por %p165, %p166
      %p168 = scmp.le.s32.totalorder 1, %s16
      %p169 = scmp.lt.s32.totalorder %s16, 3
      %p170 = pnand %p168, %p169
      %p171 = pneg %p170
      // Predicated region
      $region9: #{tpu_custom_call.1} parent=5 // pred_check
        _
      $region10: #{tpu_custom_call.1} parent=5 // pred_check_branch
        %173 = sbr.rel (%p170) target = $region12
      $region11: #{tpu_custom_call.1} parent=5 // pred_region
        %s174 = ssub.s32 %s16, 1
        // Predicated region
        $region13: #{tpu_custom_call.1} parent=11 // pred_check
          %p175 = pneg %p102
        $region14: #{tpu_custom_call.1} parent=11 // pred_check_branch
          %177 = sbr.rel (%p175) target = $region16
        $region15: #{tpu_custom_call.1} parent=11 // pred_region
          %s178 = smul.u32 16, %s30
          %180 = vsyncadd [#allocation7], 0
          %s181 = sadd.s32 %s29, %s178
          %s182 = smul.addr %s27, 16
          %s183 = sadd.s32 %s181, %s182
          %s184 = smul.addr %s183, 8
          %s185 = scalar_lea.hbm %s1, %s184
          %s186 = sshll.u32 %s185, 4
          %s187 = int_to_ptr.hbm [resolvable:$true] %s186
          %s188 = sshll.u32 [#allocation6], 4
          %s189 = int_to_ptr.vmem [resolvable:$true] %s188
          %194 = dma.hbm_to_vmem [thread:$0]  %s187, 2048, %s189, [#allocation7], 128, 128, 8
        $region16: #{tpu_custom_call.1} parent=11 // pred_fallthru
          _
        // Predicated region
        $region17: #{tpu_custom_call.1} parent=11 // pred_check
          %p195 = pneg %p130
        $region18: #{tpu_custom_call.1} parent=11 // pred_check_branch
          %197 = sbr.rel (%p195) target = $region20
        $region19: #{tpu_custom_call.1} parent=11 // pred_region
          %p198 = scmp.lt.s32.totalorder %s27, 0
          %s199 = scalar_select %p198, %s27, 0
          %p200 = scmp.lt.s32.totalorder %s29, 0
          %s201 = scalar_select %p200, %s29, 0
          %s202 = sadd.s32 %s201, %s199
          %s203 = scalar_lea.vmem %s2, %s202
        $region20: #{tpu_custom_call.1} parent=11 // pred_fallthru
          _
      $region12: #{tpu_custom_call.1} parent=5 // pred_fallthru
        _
      %p204 = scmp.lt.s32.totalorder %s16, 2
      // Predicated region
      $region21: #{tpu_custom_call.1} parent=5 // pred_check
        %p205 = pneg %p204
      $region22: #{tpu_custom_call.1} parent=5 // pred_check_branch
        %207 = sbr.rel (%p205) target = $region24
      $region23: #{tpu_custom_call.1} parent=5 // pred_region
        // Predicated region
        $region25: #{tpu_custom_call.1} parent=23 // pred_check
          %p208 = pneg %p66
        $region26: #{tpu_custom_call.1} parent=23 // pred_check_branch
          %210 = sbr.rel (%p208) target = $region28
        $region27: #{tpu_custom_call.1} parent=23 // pred_region
          %s211 = sand.u32 %s56, 1
          %s212 = scalar_lea.sflag [#allocation4], %s211
          %s213 = sand.u32 %s56, 1
          %s214 = smul.addr %s213, 256
          %s215 = scalar_lea.vmem [#allocation3], %s214
          %s216 = smul.u32 32, %s24
          %218 = vsyncadd %s212, 0
          %s219 = sadd.s32 %s26, %s216
          %s220 = smul.addr %s23, 64
          %s221 = sadd.s32 %s219, %s220
          %s222 = smul.addr %s221, 8
          %s223 = scalar_lea.hbm %s0, %s222
          %s224 = sshll.u32 %s223, 4
          %s225 = int_to_ptr.hbm [resolvable:$true] %s224
          %s226 = sshll.u32 %s215, 4
          %s227 = int_to_ptr.vmem [resolvable:$true] %s226
          %232 = dma.hbm_to_vmem [thread:$0]  %s225, 4096, %s227, %s212, 128, 128, 8
        $region28: #{tpu_custom_call.1} parent=23 // pred_fallthru
          _
      $region24: #{tpu_custom_call.1} parent=5 // pred_fallthru
        _
      %p233 = scmp.le.s32.totalorder 1, %s16
      %p234 = scmp.lt.s32.totalorder %s16, 3
      %p235 = pnand %p233, %p234
      %p236 = pneg %p235
      // Predicated region
      $region29: #{tpu_custom_call.1} parent=5 // pred_check
        _
      $region30: #{tpu_custom_call.1} parent=5 // pred_check_branch
        %238 = sbr.rel (%p235) target = $region32
      $region31: #{tpu_custom_call.1} parent=5 // pred_region
        %s239 = ssub.s32 %s16, 1
        %s240 = sand.u32 %s59, 1
        %s241 = scalar_lea.sflag [#allocation4], %s240
        %s242 = sand.u32 %s59, 1
        %s243 = smul.addr %s242, 256
        %s244 = scalar_lea.vmem [#allocation3], %s243
        // Predicated region
        $region33: #{tpu_custom_call.1} parent=31 // pred_check
          %p245 = pneg %p72
        $region34: #{tpu_custom_call.1} parent=31 // pred_check_branch
          %247 = sbr.rel (%p245) target = $region36
        $region35: #{tpu_custom_call.1} parent=31 // pred_region
          %249 = dma.done %s241, 4096
        $region36: #{tpu_custom_call.1} parent=31 // pred_fallthru
          _
        // Predicated region
        $region37: #{tpu_custom_call.1} parent=31 // pred_check
          %p250 = pneg %p102
        $region38: #{tpu_custom_call.1} parent=31 // pred_check_branch
          %252 = sbr.rel (%p250) target = $region40
        $region39: #{tpu_custom_call.1} parent=31 // pred_region
          %254 = dma.done [#allocation7], 2048
        $region40: #{tpu_custom_call.1} parent=31 // pred_fallthru
          _
        %s255 = sand.u32 %s59, 1
        %s256 = scalar_lea.sflag [#allocation4], %s255
        %s257 = sand.u32 %s59, 1
        %s258 = smul.addr %s257, 256
        %s259 = scalar_lea.vmem [#allocation3], %s258
        %p260 = pneg %p72
        %p261 = pneg %p69
        %p262 = pneg %p102
        %p263 = pneg %p99
        %p264 = scmp.lt.s32.totalorder %s27, 0
        %s265 = scalar_select %p264, %s27, 0
        %p266 = scmp.lt.s32.totalorder %s29, 0
        %s267 = scalar_select %p266, %s29, 0
        %s268 = sadd.s32 %s267, %s265
        %s269 = scalar_lea.vmem %s2, %s268
        %p270 = pneg %p130
        %p271 = pneg %p127
        %p272 = pneg %p160
        %p273 = pneg %p157
        %s274 = sand.u32 %s147, 1
        %s275 = scalar_lea.sflag [#allocation5], %s274
        %s276 = sand.u32 %s147, 1
        %s277 = smul.addr %s276, 256
        %s278 = scalar_lea.vmem [#allocation8], %s277
        %s279 = smul.u32 32, %s28
        %s280 = smul.u32 16, %s30
        %p281 = scmp.lt.s32.totalorder %s27, 0
        %s282 = scalar_select %p281, %s27, 0
        %p283 = scmp.lt.s32.totalorder %s29, 0
        %s284 = scalar_select %p283, %s29, 0
        %s285 = sadd.s32 %s284, %s282
        %s286 = scalar_lea.vmem %s2, %s285
        %s287 = smul.u32 32, %s28
        %p288 = scmp.eq.s32.totalorder %s30, 0
        // Predicated region
        $region41: #{tpu_custom_call.1} parent=31 // pred_check
          %p289 = pneg %p288
        $region42: #{tpu_custom_call.1} parent=31 // pred_check_branch
          %291 = sbr.rel (%p289) target = $region44
        $region43: #{tpu_custom_call.1} parent=31 // pred_region
          %v292 = vld [vmem:[%s286] sm:$0x1]
          %v294 = vperm.slane %v292, 0
          %296 = vst [vmem:[#allocation2] sm:$0xff] %v294
          %297 = vst [vmem:[#allocation2 + $0x8] sm:$0xff] %v294
          %298 = vst [vmem:[#allocation2 + $0x10] sm:$0xff] %v294
          %299 = vst [vmem:[#allocation2 + $0x18] sm:$0xff] %v294
          %300 = vst [vmem:[#allocation2 + $0x20] sm:$0xff] %v294
          %301 = vst [vmem:[#allocation2 + $0x28] sm:$0xff] %v294
          %302 = vst [vmem:[#allocation2 + $0x30] sm:$0xff] %v294
          %303 = vst [vmem:[#allocation2 + $0x38] sm:$0xff] %v294
          %304 = vst [vmem:[#allocation2 + $0x40] sm:$0xff] %v294
          %305 = vst [vmem:[#allocation2 + $0x48] sm:$0xff] %v294
          %306 = vst [vmem:[#allocation2 + $0x50] sm:$0xff] %v294
          %307 = vst [vmem:[#allocation2 + $0x58] sm:$0xff] %v294
          %308 = vst [vmem:[#allocation2 + $0x60] sm:$0xff] %v294
          %309 = vst [vmem:[#allocation2 + $0x68] sm:$0xff] %v294
          %310 = vst [vmem:[#allocation2 + $0x70] sm:$0xff] %v294
          %311 = vst [vmem:[#allocation2 + $0x78] sm:$0xff] %v294
          %312 = vst [vmem:[#allocation2 + $0x80] sm:$0xff] %v294
          %313 = vst [vmem:[#allocation2 + $0x88] sm:$0xff] %v294
          %314 = vst [vmem:[#allocation2 + $0x90] sm:$0xff] %v294
          %315 = vst [vmem:[#allocation2 + $0x98] sm:$0xff] %v294
          %316 = vst [vmem:[#allocation2 + $0xa0] sm:$0xff] %v294
          %317 = vst [vmem:[#allocation2 + $0xa8] sm:$0xff] %v294
          %318 = vst [vmem:[#allocation2 + $0xb0] sm:$0xff] %v294
          %319 = vst [vmem:[#allocation2 + $0xb8] sm:$0xff] %v294
          %320 = vst [vmem:[#allocation2 + $0xc0] sm:$0xff] %v294
          %321 = vst [vmem:[#allocation2 + $0xc8] sm:$0xff] %v294
          %322 = vst [vmem:[#allocation2 + $0xd0] sm:$0xff] %v294
          %323 = vst [vmem:[#allocation2 + $0xd8] sm:$0xff] %v294
          %324 = vst [vmem:[#allocation2 + $0xe0] sm:$0xff] %v294
          %325 = vst [vmem:[#allocation2 + $0xe8] sm:$0xff] %v294
          %326 = vst [vmem:[#allocation2 + $0xf0] sm:$0xff] %v294
          %327 = vst [vmem:[#allocation2 + $0xf8] sm:$0xff] %v294
        $region44: #{tpu_custom_call.1} parent=31 // pred_fallthru
          _
        %v328 = vld [vmem:[#allocation2] sm:$0xff]
        %v329 = vld [vmem:[#allocation2 + $0x8] sm:$0xff]
        %v330 = vld [vmem:[#allocation2 + $0x10] sm:$0xff]
        %v331 = vld [vmem:[#allocation2 + $0x18] sm:$0xff]
        %v332 = vld [vmem:[#allocation2 + $0x20] sm:$0xff]
        %v333 = vld [vmem:[#allocation2 + $0x28] sm:$0xff]
        %v334 = vld [vmem:[#allocation2 + $0x30] sm:$0xff]
        %v335 = vld [vmem:[#allocation2 + $0x38] sm:$0xff]
        %v336 = vld [vmem:[#allocation2 + $0x40] sm:$0xff]
        %v337 = vld [vmem:[#allocation2 + $0x48] sm:$0xff]
        %v338 = vld [vmem:[#allocation2 + $0x50] sm:$0xff]
        %v339 = vld [vmem:[#allocation2 + $0x58] sm:$0xff]
        %v340 = vld [vmem:[#allocation2 + $0x60] sm:$0xff]
        %v341 = vld [vmem:[#allocation2 + $0x68] sm:$0xff]
        %v342 = vld [vmem:[#allocation2 + $0x70] sm:$0xff]
        %v343 = vld [vmem:[#allocation2 + $0x78] sm:$0xff]
        %v344 = vld [vmem:[#allocation2 + $0x80] sm:$0xff]
        %v345 = vld [vmem:[#allocation2 + $0x88] sm:$0xff]
        %v346 = vld [vmem:[#allocation2 + $0x90] sm:$0xff]
        %v347 = vld [vmem:[#allocation2 + $0x98] sm:$0xff]
        %v348 = vld [vmem:[#allocation2 + $0xa0] sm:$0xff]
        %v349 = vld [vmem:[#allocation2 + $0xa8] sm:$0xff]
        %v350 = vld [vmem:[#allocation2 + $0xb0] sm:$0xff]
        %v351 = vld [vmem:[#allocation2 + $0xb8] sm:$0xff]
        %v352 = vld [vmem:[#allocation2 + $0xc0] sm:$0xff]
        %v353 = vld [vmem:[#allocation2 + $0xc8] sm:$0xff]
        %v354 = vld [vmem:[#allocation2 + $0xd0] sm:$0xff]
        %v355 = vld [vmem:[#allocation2 + $0xd8] sm:$0xff]
        %v356 = vld [vmem:[#allocation2 + $0xe0] sm:$0xff]
        %v357 = vld [vmem:[#allocation2 + $0xe8] sm:$0xff]
        %v358 = vld [vmem:[#allocation2 + $0xf0] sm:$0xff]
        %v359 = vld [vmem:[#allocation2 + $0xf8] sm:$0xff]
        %v360 = vld [vmem:[%s244] sm:$0xff]
        %v361 = vld [vmem:[%s244 + $0x8] sm:$0xff]
        %v362 = vld [vmem:[%s244 + $0x10] sm:$0xff]
        %v363 = vld [vmem:[%s244 + $0x18] sm:$0xff]
        %v364 = vld [vmem:[%s244 + $0x20] sm:$0xff]
        %v365 = vld [vmem:[%s244 + $0x28] sm:$0xff]
        %v366 = vld [vmem:[%s244 + $0x30] sm:$0xff]
        %v367 = vld [vmem:[%s244 + $0x38] sm:$0xff]
        %v368 = vld [vmem:[%s244 + $0x40] sm:$0xff]
        %v369 = vld [vmem:[%s244 + $0x48] sm:$0xff]
        %v370 = vld [vmem:[%s244 + $0x50] sm:$0xff]
        %v371 = vld [vmem:[%s244 + $0x58] sm:$0xff]
        %v372 = vld [vmem:[%s244 + $0x60] sm:$0xff]
        %v373 = vld [vmem:[%s244 + $0x68] sm:$0xff]
        %v374 = vld [vmem:[%s244 + $0x70] sm:$0xff]
        %v375 = vld [vmem:[%s244 + $0x78] sm:$0xff]
        %v376 = vld [vmem:[%s244 + $0x80] sm:$0xff]
        %v377 = vld [vmem:[%s244 + $0x88] sm:$0xff]
        %v378 = vld [vmem:[%s244 + $0x90] sm:$0xff]
        %v379 = vld [vmem:[%s244 + $0x98] sm:$0xff]
        %v380 = vld [vmem:[%s244 + $0xa0] sm:$0xff]
        %v381 = vld [vmem:[%s244 + $0xa8] sm:$0xff]
        %v382 = vld [vmem:[%s244 + $0xb0] sm:$0xff]
        %v383 = vld [vmem:[%s244 + $0xb8] sm:$0xff]
        %v384 = vld [vmem:[%s244 + $0xc0] sm:$0xff]
        %v385 = vld [vmem:[%s244 + $0xc8] sm:$0xff]
        %v386 = vld [vmem:[%s244 + $0xd0] sm:$0xff]
        %v387 = vld [vmem:[%s244 + $0xd8] sm:$0xff]
        %v388 = vld [vmem:[%s244 + $0xe0] sm:$0xff]
        %v389 = vld [vmem:[%s244 + $0xe8] sm:$0xff]
        %v390 = vld [vmem:[%s244 + $0xf0] sm:$0xff]
        %v391 = vld [vmem:[%s244 + $0xf8] sm:$0xff]
        %v392 = vld [vmem:[#allocation6] sm:$0xff]
        %v393 = vld [vmem:[#allocation6 + $0x8] sm:$0xff]
        %v394 = vld [vmem:[#allocation6 + $0x10] sm:$0xff]
        %v395 = vld [vmem:[#allocation6 + $0x18] sm:$0xff]
        %v396 = vld [vmem:[#allocation6 + $0x20] sm:$0xff]
        %v397 = vld [vmem:[#allocation6 + $0x28] sm:$0xff]
        %v398 = vld [vmem:[#allocation6 + $0x30] sm:$0xff]
        %v399 = vld [vmem:[#allocation6 + $0x38] sm:$0xff]
        %v400 = vld [vmem:[#allocation6 + $0x40] sm:$0xff]
        %v401 = vld [vmem:[#allocation6 + $0x48] sm:$0xff]
        %v402 = vld [vmem:[#allocation6 + $0x50] sm:$0xff]
        %v403 = vld [vmem:[#allocation6 + $0x58] sm:$0xff]
        %v404 = vld [vmem:[#allocation6 + $0x60] sm:$0xff]
        %v405 = vld [vmem:[#allocation6 + $0x68] sm:$0xff]
        %v406 = vld [vmem:[#allocation6 + $0x70] sm:$0xff]
        %v407 = vld [vmem:[#allocation6 + $0x78] sm:$0xff]
        %408 = vmatpush.msra.mxu0 %v407
        %409 = vmatpush.msra.mxu0 %v406
        %410 = vmatpush.msra.mxu0 %v405
        %411 = vmatpush.msra.mxu0 %v404
        %412 = vmatpush.msra.mxu0 %v403
        %413 = vmatpush.msra.mxu0 %v402
        %414 = vmatpush.msra.mxu0 %v401
        %415 = vmatpush.msra.mxu0 %v400
        %416 = vmatpush.msra.mxu0 %v399
        %417 = vmatpush.msra.mxu0 %v398
        %418 = vmatpush.msra.mxu0 %v397
        %419 = vmatpush.msra.mxu0 %v396
        %420 = vmatpush.msra.mxu0 %v395
        %421 = vmatpush.msra.mxu0 %v394
        %422 = vmatpush.msra.mxu0 %v393
        %423 = vmatpush.msra.mxu0 %v392
        %424 = vmatmul.f32.gmra.mxu0 %v360
        %v425 = vpop.f32.mrf.mxu0
        %v426 = vadd.f32 0.0, %v425
        %427 = vmatmul.f32.gmra.mxu0 %v361
        %v428 = vpop.f32.mrf.mxu0
        %v429 = vadd.f32 0.0, %v428
        %430 = vmatmul.f32.gmra.mxu0 %v362
        %v431 = vpop.f32.mrf.mxu0
        %v432 = vadd.f32 0.0, %v431
        %433 = vmatmul.f32.gmra.mxu0 %v363
        %v434 = vpop.f32.mrf.mxu0
        %v435 = vadd.f32 0.0, %v434
        %436 = vmatmul.f32.gmra.mxu0 %v364
        %v437 = vpop.f32.mrf.mxu0
        %v438 = vadd.f32 0.0, %v437
        %439 = vmatmul.f32.gmra.mxu0 %v365
        %v440 = vpop.f32.mrf.mxu0
        %v441 = vadd.f32 0.0, %v440
        %442 = vmatmul.f32.gmra.mxu0 %v366
        %v443 = vpop.f32.mrf.mxu0
        %v444 = vadd.f32 0.0, %v443
        %445 = vmatmul.f32.gmra.mxu0 %v367
        %v446 = vpop.f32.mrf.mxu0
        %v447 = vadd.f32 0.0, %v446
        %448 = vmatmul.f32.gmra.mxu0 %v368
        %v449 = vpop.f32.mrf.mxu0
        %v450 = vadd.f32 0.0, %v449
        %451 = vmatmul.f32.gmra.mxu0 %v369
        %v452 = vpop.f32.mrf.mxu0
        %v453 = vadd.f32 0.0, %v452
        %454 = vmatmul.f32.gmra.mxu0 %v370
        %v455 = vpop.f32.mrf.mxu0
        %v456 = vadd.f32 0.0, %v455
        %457 = vmatmul.f32.gmra.mxu0 %v371
        %v458 = vpop.f32.mrf.mxu0
        %v459 = vadd.f32 0.0, %v458
        %460 = vmatmul.f32.gmra.mxu0 %v372
        %v461 = vpop.f32.mrf.mxu0
        %v462 = vadd.f32 0.0, %v461
        %463 = vmatmul.f32.gmra.mxu0 %v373
        %v464 = vpop.f32.mrf.mxu0
        %v465 = vadd.f32 0.0, %v464
        %466 = vmatmul.f32.gmra.mxu0 %v374
        %v467 = vpop.f32.mrf.mxu0
        %v468 = vadd.f32 0.0, %v467
        %469 = vmatmul.f32.gmra.mxu0 %v375
        %v470 = vpop.f32.mrf.mxu0
        %v471 = vadd.f32 0.0, %v470
        %472 = vmatmul.f32.gmra.mxu0 %v376
        %v473 = vpop.f32.mrf.mxu0
        %v474 = vadd.f32 0.0, %v473
        %475 = vmatmul.f32.gmra.mxu0 %v377
        %v476 = vpop.f32.mrf.mxu0
        %v477 = vadd.f32 0.0, %v476
        %478 = vmatmul.f32.gmra.mxu0 %v378
        %v479 = vpop.f32.mrf.mxu0
        %v480 = vadd.f32 0.0, %v479
        %481 = vmatmul.f32.gmra.mxu0 %v379
        %v482 = vpop.f32.mrf.mxu0
        %v483 = vadd.f32 0.0, %v482
        %484 = vmatmul.f32.gmra.mxu0 %v380
        %v485 = vpop.f32.mrf.mxu0
        %v486 = vadd.f32 0.0, %v485
        %487 = vmatmul.f32.gmra.mxu0 %v381
        %v488 = vpop.f32.mrf.mxu0
        %v489 = vadd.f32 0.0, %v488
        %490 = vmatmul.f32.gmra.mxu0 %v382
        %v491 = vpop.f32.mrf.mxu0
        %v492 = vadd.f32 0.0, %v491
        %493 = vmatmul.f32.gmra.mxu0 %v383
        %v494 = vpop.f32.mrf.mxu0
        %v495 = vadd.f32 0.0, %v494
        %496 = vmatmul.f32.gmra.mxu0 %v384
        %v497 = vpop.f32.mrf.mxu0
        %v498 = vadd.f32 0.0, %v497
        %499 = vmatmul.f32.gmra.mxu0 %v385
        %v500 = vpop.f32.mrf.mxu0
        %v501 = vadd.f32 0.0, %v500
        %502 = vmatmul.f32.gmra.mxu0 %v386
        %v503 = vpop.f32.mrf.mxu0
        %v504 = vadd.f32 0.0, %v503
        %505 = vmatmul.f32.gmra.mxu0 %v387
        %v506 = vpop.f32.mrf.mxu0
        %v507 = vadd.f32 0.0, %v506
        %508 = vmatmul.f32.gmra.mxu0 %v388
        %v509 = vpop.f32.mrf.mxu0
        %v510 = vadd.f32 0.0, %v509
        %511 = vmatmul.f32.gmra.mxu0 %v389
        %v512 = vpop.f32.mrf.mxu0
        %v513 = vadd.f32 0.0, %v512
        %514 = vmatmul.f32.gmra.mxu0 %v390
        %v515 = vpop.f32.mrf.mxu0
        %v516 = vadd.f32 0.0, %v515
        %517 = vmatmul.f32.gmra.mxu0 %v391
        %v518 = vpop.f32.mrf.mxu0
        %v519 = vadd.f32 0.0, %v518
        %520 = vdwg.mxu0
        %v521 = vadd.f32 %v328, %v426
        %v522 = vadd.f32 %v329, %v429
        %v523 = vadd.f32 %v330, %v432
        %v524 = vadd.f32 %v331, %v435
        %v525 = vadd.f32 %v332, %v438
        %v526 = vadd.f32 %v333, %v441
        %v527 = vadd.f32 %v334, %v444
        %v528 = vadd.f32 %v335, %v447
        %v529 = vadd.f32 %v336, %v450
        %v530 = vadd.f32 %v337, %v453
        %v531 = vadd.f32 %v338, %v456
        %v532 = vadd.f32 %v339, %v459
        %v533 = vadd.f32 %v340, %v462
        %v534 = vadd.f32 %v341, %v465
        %v535 = vadd.f32 %v342, %v468
        %v536 = vadd.f32 %v343, %v471
        %v537 = vadd.f32 %v344, %v474
        %v538 = vadd.f32 %v345, %v477
        %v539 = vadd.f32 %v346, %v480
        %v540 = vadd.f32 %v347, %v483
        %v541 = vadd.f32 %v348, %v486
        %v542 = vadd.f32 %v349, %v489
        %v543 = vadd.f32 %v350, %v492
        %v544 = vadd.f32 %v351, %v495
        %v545 = vadd.f32 %v352, %v498
        %v546 = vadd.f32 %v353, %v501
        %v547 = vadd.f32 %v354, %v504
        %v548 = vadd.f32 %v355, %v507
        %v549 = vadd.f32 %v356, %v510
        %v550 = vadd.f32 %v357, %v513
        %v551 = vadd.f32 %v358, %v516
        %v552 = vadd.f32 %v359, %v519
        %553 = vst [vmem:[#allocation2] sm:$0xff] %v521
        %554 = vst [vmem:[#allocation2 + $0x8] sm:$0xff] %v522
        %555 = vst [vmem:[#allocation2 + $0x10] sm:$0xff] %v523
        %556 = vst [vmem:[#allocation2 + $0x18] sm:$0xff] %v524
        %557 = vst [vmem:[#allocation2 + $0x20] sm:$0xff] %v525
        %558 = vst [vmem:[#allocation2 + $0x28] sm:$0xff] %v526
        %559 = vst [vmem:[#allocation2 + $0x30] sm:$0xff] %v527
        %560 = vst [vmem:[#allocation2 + $0x38] sm:$0xff] %v528
        %561 = vst [vmem:[#allocation2 + $0x40] sm:$0xff] %v529
        %562 = vst [vmem:[#allocation2 + $0x48] sm:$0xff] %v530
        %563 = vst [vmem:[#allocation2 + $0x50] sm:$0xff] %v531
        %564 = vst [vmem:[#allocation2 + $0x58] sm:$0xff] %v532
        %565 = vst [vmem:[#allocation2 + $0x60] sm:$0xff] %v533
        %566 = vst [vmem:[#allocation2 + $0x68] sm:$0xff] %v534
        %567 = vst [vmem:[#allocation2 + $0x70] sm:$0xff] %v535
        %568 = vst [vmem:[#allocation2 + $0x78] sm:$0xff] %v536
        %569 = vst [vmem:[#allocation2 + $0x80] sm:$0xff] %v537
        %570 = vst [vmem:[#allocation2 + $0x88] sm:$0xff] %v538
        %571 = vst [vmem:[#allocation2 + $0x90] sm:$0xff] %v539
        %572 = vst [vmem:[#allocation2 + $0x98] sm:$0xff] %v540
        %573 = vst [vmem:[#allocation2 + $0xa0] sm:$0xff] %v541
        %574 = vst [vmem:[#allocation2 + $0xa8] sm:$0xff] %v542
        %575 = vst [vmem:[#allocation2 + $0xb0] sm:$0xff] %v543
        %576 = vst [vmem:[#allocation2 + $0xb8] sm:$0xff] %v544
        %577 = vst [vmem:[#allocation2 + $0xc0] sm:$0xff] %v545
        %578 = vst [vmem:[#allocation2 + $0xc8] sm:$0xff] %v546
        %579 = vst [vmem:[#allocation2 + $0xd0] sm:$0xff] %v547
        %580 = vst [vmem:[#allocation2 + $0xd8] sm:$0xff] %v548
        %581 = vst [vmem:[#allocation2 + $0xe0] sm:$0xff] %v549
        %582 = vst [vmem:[#allocation2 + $0xe8] sm:$0xff] %v550
        %583 = vst [vmem:[#allocation2 + $0xf0] sm:$0xff] %v551
        %584 = vst [vmem:[#allocation2 + $0xf8] sm:$0xff] %v552
        // Predicated region
        $region45: #{tpu_custom_call.1} parent=31 // pred_check
          %p585 = pneg %p288
        $region46: #{tpu_custom_call.1} parent=31 // pred_check_branch
          %587 = sbr.rel (%p585) target = $region48
        $region47: #{tpu_custom_call.1} parent=31 // pred_region
          %v588 = vld [vmem:[#allocation2] sm:$0xff]
          %v589 = vld [vmem:[#allocation2 + $0x8] sm:$0xff]
          %v590 = vld [vmem:[#allocation2 + $0x10] sm:$0xff]
          %v591 = vld [vmem:[#allocation2 + $0x18] sm:$0xff]
          %v592 = vld [vmem:[#allocation2 + $0x20] sm:$0xff]
          %v593 = vld [vmem:[#allocation2 + $0x28] sm:$0xff]
          %v594 = vld [vmem:[#allocation2 + $0x30] sm:$0xff]
          %v595 = vld [vmem:[#allocation2 + $0x38] sm:$0xff]
          %v596 = vld [vmem:[#allocation2 + $0x40] sm:$0xff]
          %v597 = vld [vmem:[#allocation2 + $0x48] sm:$0xff]
          %v598 = vld [vmem:[#allocation2 + $0x50] sm:$0xff]
          %v599 = vld [vmem:[#allocation2 + $0x58] sm:$0xff]
          %v600 = vld [vmem:[#allocation2 + $0x60] sm:$0xff]
          %v601 = vld [vmem:[#allocation2 + $0x68] sm:$0xff]
          %v602 = vld [vmem:[#allocation2 + $0x70] sm:$0xff]
          %v603 = vld [vmem:[#allocation2 + $0x78] sm:$0xff]
          %v604 = vld [vmem:[#allocation2 + $0x80] sm:$0xff]
          %v605 = vld [vmem:[#allocation2 + $0x88] sm:$0xff]
          %v606 = vld [vmem:[#allocation2 + $0x90] sm:$0xff]
          %v607 = vld [vmem:[#allocation2 + $0x98] sm:$0xff]
          %v608 = vld [vmem:[#allocation2 + $0xa0] sm:$0xff]
          %v609 = vld [vmem:[#allocation2 + $0xa8] sm:$0xff]
          %v610 = vld [vmem:[#allocation2 + $0xb0] sm:$0xff]
          %v611 = vld [vmem:[#allocation2 + $0xb8] sm:$0xff]
          %v612 = vld [vmem:[#allocation2 + $0xc0] sm:$0xff]
          %v613 = vld [vmem:[#allocation2 + $0xc8] sm:$0xff]
          %v614 = vld [vmem:[#allocation2 + $0xd0] sm:$0xff]
          %v615 = vld [vmem:[#allocation2 + $0xd8] sm:$0xff]
          %v616 = vld [vmem:[#allocation2 + $0xe0] sm:$0xff]
          %v617 = vld [vmem:[#allocation2 + $0xe8] sm:$0xff]
          %v618 = vld [vmem:[#allocation2 + $0xf0] sm:$0xff]
          %v619 = vld [vmem:[#allocation2 + $0xf8] sm:$0xff]
          %620 = vst [vmem:[%s278] sm:$0xff] %v588
          %621 = vst [vmem:[%s278 + $0x8] sm:$0xff] %v589
          %622 = vst [vmem:[%s278 + $0x10] sm:$0xff] %v590
          %623 = vst [vmem:[%s278 + $0x18] sm:$0xff] %v591
          %624 = vst [vmem:[%s278 + $0x20] sm:$0xff] %v592
          %625 = vst [vmem:[%s278 + $0x28] sm:$0xff] %v593
          %626 = vst [vmem:[%s278 + $0x30] sm:$0xff] %v594
          %627 = vst [vmem:[%s278 + $0x38] sm:$0xff] %v595
          %628 = vst [vmem:[%s278 + $0x40] sm:$0xff] %v596
          %629 = vst [vmem:[%s278 + $0x48] sm:$0xff] %v597
          %630 = vst [vmem:[%s278 + $0x50] sm:$0xff] %v598
          %631 = vst [vmem:[%s278 + $0x58] sm:$0xff] %v599
          %632 = vst [vmem:[%s278 + $0x60] sm:$0xff] %v600
          %633 = vst [vmem:[%s278 + $0x68] sm:$0xff] %v601
          %634 = vst [vmem:[%s278 + $0x70] sm:$0xff] %v602
          %635 = vst [vmem:[%s278 + $0x78] sm:$0xff] %v603
          %636 = vst [vmem:[%s278 + $0x80] sm:$0xff] %v604
          %637 = vst [vmem:[%s278 + $0x88] sm:$0xff] %v605
          %638 = vst [vmem:[%s278 + $0x90] sm:$0xff] %v606
          %639 = vst [vmem:[%s278 + $0x98] sm:$0xff] %v607
          %640 = vst [vmem:[%s278 + $0xa0] sm:$0xff] %v608
          %641 = vst [vmem:[%s278 + $0xa8] sm:$0xff] %v609
          %642 = vst [vmem:[%s278 + $0xb0] sm:$0xff] %v610
          %643 = vst [vmem:[%s278 + $0xb8] sm:$0xff] %v611
          %644 = vst [vmem:[%s278 + $0xc0] sm:$0xff] %v612
          %645 = vst [vmem:[%s278 + $0xc8] sm:$0xff] %v613
          %646 = vst [vmem:[%s278 + $0xd0] sm:$0xff] %v614
          %647 = vst [vmem:[%s278 + $0xd8] sm:$0xff] %v615
          %648 = vst [vmem:[%s278 + $0xe0] sm:$0xff] %v616
          %649 = vst [vmem:[%s278 + $0xe8] sm:$0xff] %v617
          %650 = vst [vmem:[%s278 + $0xf0] sm:$0xff] %v618
          %651 = vst [vmem:[%s278 + $0xf8] sm:$0xff] %v619
        $region48: #{tpu_custom_call.1} parent=31 // pred_fallthru
          _
        %s652 = sand.u32 %s147, 1
        %s653 = scalar_lea.sflag [#allocation5], %s652
        %s654 = sand.u32 %s147, 1
        %s655 = smul.addr %s654, 256
        %s656 = scalar_lea.vmem [#allocation8], %s655
        // Predicated region
        $region49: #{tpu_custom_call.1} parent=31 // pred_check
          %p657 = pneg %p157
        $region50: #{tpu_custom_call.1} parent=31 // pred_check_branch
          %659 = sbr.rel (%p657) target = $region52
        $region51: #{tpu_custom_call.1} parent=31 // pred_region
          %s660 = smul.u32 32, %s28
          %662 = vsyncadd %s653, 0
          %s663 = sadd.s32 %s29, %s660
          %s664 = smul.addr %s27, 64
          %s665 = sadd.s32 %s663, %s664
          %s666 = smul.addr %s665, 8
          %s667 = scalar_lea.hbm %s3, %s666
          %s668 = sshll.u32 %s656, 4
          %s669 = int_to_ptr.vmem [resolvable:$true] %s668
          %s670 = sshll.u32 %s667, 4
          %s671 = int_to_ptr.hbm [resolvable:$true] %s670
          %676 = dma.vmem_to_hbm [thread:$0]  %s669, 4096, %s671, %s653, 128, 128, 8
        $region52: #{tpu_custom_call.1} parent=31 // pred_fallthru
          _
      $region32: #{tpu_custom_call.1} parent=5 // pred_fallthru
        _
      %p677 = scmp.le.s32.totalorder 2, %s16
      // Predicated region
      $region53: #{tpu_custom_call.1} parent=5 // pred_check
        %p678 = pneg %p677
      $region54: #{tpu_custom_call.1} parent=5 // pred_check_branch
        %680 = sbr.rel (%p678) target = $region56
      $region55: #{tpu_custom_call.1} parent=5 // pred_region
        %s681 = ssub.s32 %s16, 2
        // Predicated region
        $region57: #{tpu_custom_call.1} parent=55 // pred_check
          %p682 = pneg %p163
        $region58: #{tpu_custom_call.1} parent=55 // pred_check_branch
          %684 = sbr.rel (%p682) target = $region60
        $region59: #{tpu_custom_call.1} parent=55 // pred_region
          %s685 = sand.u32 %s148, 1
          %s686 = scalar_lea.sflag [#allocation5], %s685
          %s687 = sand.u32 %s148, 1
          %s688 = smul.addr %s687, 256
          %s689 = scalar_lea.vmem [#allocation8], %s688
          %691 = dma.done %s686, 4096
        $region60: #{tpu_custom_call.1} parent=55 // pred_fallthru
          _
      $region56: #{tpu_custom_call.1} parent=5 // pred_fallthru
        _
    $region6: #{tpu_custom_call.1} parent=1 // loop_footer
      %s20 = sadd.s32 1, %s16
    $region7: #{tpu_custom_call.1} parent=1 // loop_footer_branch
      %15 = sbr.rel target = $region3
    $region8: #{tpu_custom_call.1} parent=1 // loop_exit
      _
    %692 = vsyncpa [#allocation4], 1
    %s693 = scalar_lea.sflag [#allocation4], 1
    %694 = vsyncpa %s693, 1
    %695 = vsyncpa [#allocation7], 1
    %696 = vsyncpa [#allocation5], 1
    %s697 = scalar_lea.sflag [#allocation5], 1
    %698 = vsyncpa %s697, 1

</llo_original>
